<compile_context>
chip_gen: v5e
topology: v5e:2x2
jax: 0.10.0
libtpu: 0.0.40
codegen_flags: <defaults>
</compile_context>

<pallas_src>
import jax
import jax.numpy as jnp
from jax import lax
from jax.experimental import pallas as pl
from jax.experimental.pallas import tpu as pltpu


def encoder_kernel(x_ref, wt_ref, o_ref):
    # x_ref : (TB, C, HW) f32  -- backbone features, channels-first (native layout)
    # wt_ref: (NP, C)     f32  -- W^T * (1/HW), rows zero-padded to NP (mult. of 8)
    # o_ref : (TB, NP, 1) f32
    tb = x_ref.shape[0]
    x = x_ref[...]
    wt = jnp.broadcast_to(wt_ref[...], (tb,) + wt_ref.shape)       # (TB, NP, C)
    # Batched MXU matmul; contraction over C = lhs lane axis / rhs sublane axis,
    # so Mosaic emits no transposes.  f32 accumulation.
    a = lax.dot_general(
        wt, x,
        dimension_numbers=(((2,), (1,)), ((0,), (0,))),
        preferred_element_type=jnp.float32)                        # (TB, NP, HW)
    # Spatial mean (1/HW already folded into wt): lane-axis sum with keepdims so
    # the (TB, NP, 1) result needs no relayout before the store.
    o_ref[...] = jnp.sum(a, axis=-1, keepdims=True)


def encoder_forward(feat_nchw, W, max_tile_bytes=8 << 20):
    """feat_nchw: (B, C, H, W) float32 backbone features; W: (C, N_out).

    Returns (B, N_out) = AdaptiveAvgPool2d(1)(feat).squeeze(-1, -2) @ W.
    """
    B, C, H, Wd = feat_nchw.shape
    HW = H * Wd
    n_out = W.shape[1]
    NP = ((n_out + 7) // 8) * 8          # sublane-aligned output rows

    # Channels-first features; only a minor-dim merge (no transpose / extra pass).
    x = feat_nchw.reshape(B, C, HW)

    # Fold the 1/HW mean into the tiny projection weight, store it transposed so
    # the contraction dim C lands on the MXU lhs lane axis; pad rows to NP.
    wt = jnp.zeros((NP, C), dtype=jnp.float32)
    wt = wt.at[:n_out, :].set(W.T.astype(jnp.float32) / HW)

    # Batch tile: biggest tile whose lane-padded footprint stays <= max_tile_bytes,
    # so two in-flight buffers fit comfortably in scoped VMEM on v5e/v6e/v7x.
    hw_pad = ((HW + 127) // 128) * 128
    per_sample_bytes = C * hw_pad * 4
    TB = max(1, min(B, max_tile_bytes // per_sample_bytes))
    if TB >= 8:
        TB = (TB // 8) * 8

    grid = (pl.cdiv(B, TB),)

    out = pl.pallas_call(
        encoder_kernel,
        out_shape=jax.ShapeDtypeStruct((B, NP, 1), jnp.float32),
        grid_spec=pltpu.PrefetchScalarGridSpec(
            num_scalar_prefetch=0,
            grid=grid,
            in_specs=[
                # Batch-tiled features: auto double-buffered HBM->VMEM pipeline.
                pl.BlockSpec((TB, C, HW), lambda i: (i, 0, 0)),
                # Weight: grid-invariant block index -> DMA'd once, stays resident.
                pl.BlockSpec((NP, C), lambda i: (0, 0)),
            ],
            out_specs=pl.BlockSpec((TB, NP, 1), lambda i: (i, 0, 0)),
        ),
        compiler_params=pltpu.CompilerParams(
            dimension_semantics=("parallel",),   # shard batch tiles across TCs (v7x)
            vmem_limit_bytes=32 << 20,           # v5e default is 16 MiB; add headroom
        ),
    )(x, wt)

    return out[:, :n_out, 0]


def make_params(key, c_in=960, c_out=4):
    # nn.init.xavier_normal_(W, gain=1): std = gain * sqrt(2 / (fan_in + fan_out))
    std = (2.0 / (c_in + c_out)) ** 0.5
    return jax.random.normal(key, (c_in, c_out), dtype=jnp.float32) * std


if __name__ == "__main__":
    key = jax.random.PRNGKey(0)
    k_feat, k_w = jax.random.split(key)

    B, C, H, Wd = 2, 960, 8, 8  # small synthetic backbone feature map
    feat = jax.random.normal(k_feat, (B, C, H, Wd), dtype=jnp.float32)
    W = make_params(k_w, C, 4)

    out = encoder_forward(feat, W)
    out = jax.block_until_ready(out)

    # Reference in plain JAX (AdaptiveAvgPool2d(1) + squeeze + mm)
    ref = jnp.mean(feat, axis=(2, 3)) @ W
    assert out.shape == (B, 4)
    assert jnp.allclose(out, ref, atol=2e-4, rtol=2e-4)

    print("KERNEL_OK")
</pallas_src>

<mosaic_0001>
module attributes {stable_mosaic.version = 11 : i64} {
  func.func @encoder_kernel(%arg0: i32, %arg1: memref<2x960x64xf32, #tpu.memory_space<vmem>>, %arg2: memref<8x960xf32, #tpu.memory_space<vmem>>, %arg3: memref<2x8x1xf32, #tpu.memory_space<vmem>>) attributes {dimension_semantics = [#tpu.dimension_semantics<parallel>], iteration_bounds = array<i64: 1>, scalar_prefetch = 0 : i64, scratch_operands = 0 : i64, tpu.core_type = #tpu.core_type<tc>, window_params = [{transform_indices = @transform_0, window_bounds = array<i64: 2, 960, 64>}, {pipeline_mode = #tpu.pipeline_mode<synchronous>, transform_indices = @transform_1, window_bounds = array<i64: 8, 960>}, {transform_indices = @transform_2, window_bounds = array<i64: 2, 8, 1>}]} {
    %c0 = arith.constant 0 : index
    %c0_0 = arith.constant 0 : index
    %c0_1 = arith.constant 0 : index
    %0 = vector.load %arg1[%c0, %c0_0, %c0_1] : memref<2x960x64xf32, #tpu.memory_space<vmem>>, vector<2x960x64xf32>
    %c0_2 = arith.constant 0 : index
    %c0_3 = arith.constant 0 : index
    %1 = vector.load %arg2[%c0_2, %c0_3] : memref<8x960xf32, #tpu.memory_space<vmem>>, vector<8x960xf32>
    %2 = vector.shape_cast %1 : vector<8x960xf32> to vector<1x8x960xf32>
    %3 = vector.broadcast %2 : vector<1x8x960xf32> to vector<2x8x960xf32>
    %cst = arith.constant dense<0.000000e+00> : vector<2x8x64xf32>
    %4 = tpu.matmul %3, %0, %cst {dimension_numbers = #tpu.dot_dimension_numbers<[2], [1], [1], [2], [0, 0, 0, 1, 1, 2], [0], [0]>} : vector<2x8x960xf32>, vector<2x960x64xf32>, vector<2x8x64xf32> -> vector<2x8x64xf32>
    %cst_4 = arith.constant dense<0.000000e+00> : vector<2x8xf32>
    %5 = vector.multi_reduction <add>, %4, %cst_4 [2] : vector<2x8x64xf32> to vector<2x8xf32>
    %6 = vector.shape_cast %5 : vector<2x8xf32> to vector<2x8x1xf32>
    %c0_5 = arith.constant 0 : index
    %c0_6 = arith.constant 0 : index
    %c0_7 = arith.constant 0 : index
    %7 = vector.load %arg3[%c0_5, %c0_6, %c0_7] : memref<2x8x1xf32, #tpu.memory_space<vmem>>, vector<2x8x1xf32>
    tpu.vector_store %arg3[%c0_5, %c0_6, %c0_7], %6 {strides = array<i32>} : memref<2x8x1xf32, #tpu.memory_space<vmem>>, vector<2x8x1xf32>,
    return
  }
  func.func @transform_0(%arg0: i32) -> (i32, i32, i32) {
    %c0_i32 = arith.constant 0 : i32
    %c0_i32_0 = arith.constant 0 : i32
    %c0_i32_1 = arith.constant 0 : i32
    return %arg0, %c0_i32, %c0_i32_0 : i32, i32, i32
  }
  func.func @transform_1(%arg0: i32) -> (i32, i32) {
    %c0_i32 = arith.constant 0 : i32
    %c0_i32_0 = arith.constant 0 : i32
    %c0_i32_1 = arith.constant 0 : i32
    return %c0_i32, %c0_i32_0 : i32, i32
  }
  func.func @transform_2(%arg0: i32) -> (i32, i32, i32) {
    %c0_i32 = arith.constant 0 : i32
    %c0_i32_0 = arith.constant 0 : i32
    %c0_i32_1 = arith.constant 0 : i32
    return %arg0, %c0_i32, %c0_i32_0 : i32, i32, i32
  }
}

</mosaic_0001>

<llo_original>
// kernel: tpu_custom_call.1
$region0: #{tpu_custom_call.1}
  #allocation0 [shape = 'u32[]', space=smem, size = 0x4, offset = 0x4, fixed_abs, tag = 'smem constant byte address 0x4 - core index']
  #allocation1 [shape = 'u32[72,128]{1,0:T(1,128)}', space=vmem, size = 0x9000, scoped, tag = 'internal scratch']
  %s0 = inlined_call_operand.vmem [shape: f32[2,960,64], index: 0, kind: input, shape index: {}]
  %s1 = inlined_call_operand.vmem [shape: f32[8,960], index: 1, kind: input, shape index: {}]
  %s2 = inlined_call_operand.vmem [shape: f32[2,8,1], index: 2, kind: output, shape index: {}]
  %s3 = sld [smem:[#allocation0]]
  $region18: #{tpu_custom_call.1} parent=0
    _
  %s5 = ssub.s32 1, %s3
  %s6 = scalar_select 0, %s5, %s3
  // Predicated region
  $region2: #{tpu_custom_call.1} parent=0 // pred_check
    _
  $region3: #{tpu_custom_call.1} parent=0 // pred_check_branch
    %8 = sbr.rel (0) target = $region5
  $region4: #{tpu_custom_call.1} parent=0 // pred_region
    _
  $region5: #{tpu_custom_call.1} parent=0 // pred_fallthru
    _
  // Predicated region
  $region6: #{tpu_custom_call.1} parent=0 // pred_check
    _
  $region7: #{tpu_custom_call.1} parent=0 // pred_check_branch
    %10 = sbr.rel (0) target = $region9
  $region8: #{tpu_custom_call.1} parent=0 // pred_region
    _
  $region9: #{tpu_custom_call.1} parent=0 // pred_fallthru
    _
  %v11 = vld [vmem:[%s0] sm:$0xff]
  %v12 = vld [vmem:[%s0 + $0x8] sm:$0xff]
  %v13 = vld [vmem:[%s0 + $0x10] sm:$0xff]
  %v14 = vld [vmem:[%s0 + $0x18] sm:$0xff]
  %v15 = vld [vmem:[%s0 + $0x20] sm:$0xff]
  %v16 = vld [vmem:[%s0 + $0x28] sm:$0xff]
  %v17 = vld [vmem:[%s0 + $0x30] sm:$0xff]
  %v18 = vld [vmem:[%s0 + $0x38] sm:$0xff]
  %v19 = vld [vmem:[%s0 + $0x40] sm:$0xff]
  %v20 = vld [vmem:[%s0 + $0x48] sm:$0xff]
  %v21 = vld [vmem:[%s0 + $0x50] sm:$0xff]
  %v22 = vld [vmem:[%s0 + $0x58] sm:$0xff]
  %v23 = vld [vmem:[%s0 + $0x60] sm:$0xff]
  %v24 = vld [vmem:[%s0 + $0x68] sm:$0xff]
  %v25 = vld [vmem:[%s0 + $0x70] sm:$0xff]
  %v26 = vld [vmem:[%s0 + $0x78] sm:$0xff]
  %v27 = vld [vmem:[%s0 + $0x80] sm:$0xff]
  %v28 = vld [vmem:[%s0 + $0x88] sm:$0xff]
  %v29 = vld [vmem:[%s0 + $0x90] sm:$0xff]
  %v30 = vld [vmem:[%s0 + $0x98] sm:$0xff]
  %v31 = vld [vmem:[%s0 + $0xa0] sm:$0xff]
  %v32 = vld [vmem:[%s0 + $0xa8] sm:$0xff]
  %v33 = vld [vmem:[%s0 + $0xb0] sm:$0xff]
  %v34 = vld [vmem:[%s0 + $0xb8] sm:$0xff]
  %v35 = vld [vmem:[%s0 + $0xc0] sm:$0xff]
  %v36 = vld [vmem:[%s0 + $0xc8] sm:$0xff]
  %v37 = vld [vmem:[%s0 + $0xd0] sm:$0xff]
  %v38 = vld [vmem:[%s0 + $0xd8] sm:$0xff]
  %v39 = vld [vmem:[%s0 + $0xe0] sm:$0xff]
  %v40 = vld [vmem:[%s0 + $0xe8] sm:$0xff]
  %v41 = vld [vmem:[%s0 + $0xf0] sm:$0xff]
  %v42 = vld [vmem:[%s0 + $0xf8] sm:$0xff]
  %v43 = vld [vmem:[%s0 + $0x100] sm:$0xff]
  %v44 = vld [vmem:[%s0 + $0x108] sm:$0xff]
  %v45 = vld [vmem:[%s0 + $0x110] sm:$0xff]
  %v46 = vld [vmem:[%s0 + $0x118] sm:$0xff]
  %v47 = vld [vmem:[%s0 + $0x120] sm:$0xff]
  %v48 = vld [vmem:[%s0 + $0x128] sm:$0xff]
  %v49 = vld [vmem:[%s0 + $0x130] sm:$0xff]
  %v50 = vld [vmem:[%s0 + $0x138] sm:$0xff]
  %v51 = vld [vmem:[%s0 + $0x140] sm:$0xff]
  %v52 = vld [vmem:[%s0 + $0x148] sm:$0xff]
  %v53 = vld [vmem:[%s0 + $0x150] sm:$0xff]
  %v54 = vld [vmem:[%s0 + $0x158] sm:$0xff]
  %v55 = vld [vmem:[%s0 + $0x160] sm:$0xff]
  %v56 = vld [vmem:[%s0 + $0x168] sm:$0xff]
  %v57 = vld [vmem:[%s0 + $0x170] sm:$0xff]
  %v58 = vld [vmem:[%s0 + $0x178] sm:$0xff]
  %v59 = vld [vmem:[%s0 + $0x180] sm:$0xff]
  %v60 = vld [vmem:[%s0 + $0x188] sm:$0xff]
  %v61 = vld [vmem:[%s0 + $0x190] sm:$0xff]
  %v62 = vld [vmem:[%s0 + $0x198] sm:$0xff]
  %v63 = vld [vmem:[%s0 + $0x1a0] sm:$0xff]
  %v64 = vld [vmem:[%s0 + $0x1a8] sm:$0xff]
  %v65 = vld [vmem:[%s0 + $0x1b0] sm:$0xff]
  %v66 = vld [vmem:[%s0 + $0x1b8] sm:$0xff]
  %v67 = vld [vmem:[%s0 + $0x1c0] sm:$0xff]
  %v68 = vld [vmem:[%s0 + $0x1c8] sm:$0xff]
  %v69 = vld [vmem:[%s0 + $0x1d0] sm:$0xff]
  %v70 = vld [vmem:[%s0 + $0x1d8] sm:$0xff]
  %v71 = vld [vmem:[%s0 + $0x1e0] sm:$0xff]
  %v72 = vld [vmem:[%s0 + $0x1e8] sm:$0xff]
  %v73 = vld [vmem:[%s0 + $0x1f0] sm:$0xff]
  %v74 = vld [vmem:[%s0 + $0x1f8] sm:$0xff]
  %v75 = vld [vmem:[%s0 + $0x200] sm:$0xff]
  %v76 = vld [vmem:[%s0 + $0x208] sm:$0xff]
  %v77 = vld [vmem:[%s0 + $0x210] sm:$0xff]
  %v78 = vld [vmem:[%s0 + $0x218] sm:$0xff]
  %v79 = vld [vmem:[%s0 + $0x220] sm:$0xff]
  %v80 = vld [vmem:[%s0 + $0x228] sm:$0xff]
  %v81 = vld [vmem:[%s0 + $0x230] sm:$0xff]
  %v82 = vld [vmem:[%s0 + $0x238] sm:$0xff]
  %v83 = vld [vmem:[%s0 + $0x240] sm:$0xff]
  %v84 = vld [vmem:[%s0 + $0x248] sm:$0xff]
  %v85 = vld [vmem:[%s0 + $0x250] sm:$0xff]
  %v86 = vld [vmem:[%s0 + $0x258] sm:$0xff]
  %v87 = vld [vmem:[%s0 + $0x260] sm:$0xff]
  %v88 = vld [vmem:[%s0 + $0x268] sm:$0xff]
  %v89 = vld [vmem:[%s0 + $0x270] sm:$0xff]
  %v90 = vld [vmem:[%s0 + $0x278] sm:$0xff]
  %v91 = vld [vmem:[%s0 + $0x280] sm:$0xff]
  %v92 = vld [vmem:[%s0 + $0x288] sm:$0xff]
  %v93 = vld [vmem:[%s0 + $0x290] sm:$0xff]
  %v94 = vld [vmem:[%s0 + $0x298] sm:$0xff]
  %v95 = vld [vmem:[%s0 + $0x2a0] sm:$0xff]
  %v96 = vld [vmem:[%s0 + $0x2a8] sm:$0xff]
  %v97 = vld [vmem:[%s0 + $0x2b0] sm:$0xff]
  %v98 = vld [vmem:[%s0 + $0x2b8] sm:$0xff]
  %v99 = vld [vmem:[%s0 + $0x2c0] sm:$0xff]
  %v100 = vld [vmem:[%s0 + $0x2c8] sm:$0xff]
  %v101 = vld [vmem:[%s0 + $0x2d0] sm:$0xff]
  %v102 = vld [vmem:[%s0 + $0x2d8] sm:$0xff]
  %v103 = vld [vmem:[%s0 + $0x2e0] sm:$0xff]
  %v104 = vld [vmem:[%s0 + $0x2e8] sm:$0xff]
  %v105 = vld [vmem:[%s0 + $0x2f0] sm:$0xff]
  %v106 = vld [vmem:[%s0 + $0x2f8] sm:$0xff]
  %v107 = vld [vmem:[%s0 + $0x300] sm:$0xff]
  %v108 = vld [vmem:[%s0 + $0x308] sm:$0xff]
  %v109 = vld [vmem:[%s0 + $0x310] sm:$0xff]
  %v110 = vld [vmem:[%s0 + $0x318] sm:$0xff]
  %v111 = vld [vmem:[%s0 + $0x320] sm:$0xff]
  %v112 = vld [vmem:[%s0 + $0x328] sm:$0xff]
  %v113 = vld [vmem:[%s0 + $0x330] sm:$0xff]
  %v114 = vld [vmem:[%s0 + $0x338] sm:$0xff]
  %v115 = vld [vmem:[%s0 + $0x340] sm:$0xff]
  %v116 = vld [vmem:[%s0 + $0x348] sm:$0xff]
  %v117 = vld [vmem:[%s0 + $0x350] sm:$0xff]
  %v118 = vld [vmem:[%s0 + $0x358] sm:$0xff]
  %v119 = vld [vmem:[%s0 + $0x360] sm:$0xff]
  %v120 = vld [vmem:[%s0 + $0x368] sm:$0xff]
  %v121 = vld [vmem:[%s0 + $0x370] sm:$0xff]
  %v122 = vld [vmem:[%s0 + $0x378] sm:$0xff]
  %v123 = vld [vmem:[%s0 + $0x380] sm:$0xff]
  %v124 = vld [vmem:[%s0 + $0x388] sm:$0xff]
  %v125 = vld [vmem:[%s0 + $0x390] sm:$0xff]
  %v126 = vld [vmem:[%s0 + $0x398] sm:$0xff]
  %v127 = vld [vmem:[%s0 + $0x3a0] sm:$0xff]
  %v128 = vld [vmem:[%s0 + $0x3a8] sm:$0xff]
  %v129 = vld [vmem:[%s0 + $0x3b0] sm:$0xff]
  %v130 = vld [vmem:[%s0 + $0x3b8] sm:$0xff]
  %v131 = vld [vmem:[%s0 + $0x3c0] sm:$0xff]
  %v132 = vld [vmem:[%s0 + $0x3c8] sm:$0xff]
  %v133 = vld [vmem:[%s0 + $0x3d0] sm:$0xff]
  %v134 = vld [vmem:[%s0 + $0x3d8] sm:$0xff]
  %v135 = vld [vmem:[%s0 + $0x3e0] sm:$0xff]
  %v136 = vld [vmem:[%s0 + $0x3e8] sm:$0xff]
  %v137 = vld [vmem:[%s0 + $0x3f0] sm:$0xff]
  %v138 = vld [vmem:[%s0 + $0x3f8] sm:$0xff]
  %v139 = vld [vmem:[%s0 + $0x400] sm:$0xff]
  %v140 = vld [vmem:[%s0 + $0x408] sm:$0xff]
  %v141 = vld [vmem:[%s0 + $0x410] sm:$0xff]
  %v142 = vld [vmem:[%s0 + $0x418] sm:$0xff]
  %v143 = vld [vmem:[%s0 + $0x420] sm:$0xff]
  %v144 = vld [vmem:[%s0 + $0x428] sm:$0xff]
  %v145 = vld [vmem:[%s0 + $0x430] sm:$0xff]
  %v146 = vld [vmem:[%s0 + $0x438] sm:$0xff]
  %v147 = vld [vmem:[%s0 + $0x440] sm:$0xff]
  %v148 = vld [vmem:[%s0 + $0x448] sm:$0xff]
  %v149 = vld [vmem:[%s0 + $0x450] sm:$0xff]
  %v150 = vld [vmem:[%s0 + $0x458] sm:$0xff]
  %v151 = vld [vmem:[%s0 + $0x460] sm:$0xff]
  %v152 = vld [vmem:[%s0 + $0x468] sm:$0xff]
  %v153 = vld [vmem:[%s0 + $0x470] sm:$0xff]
  %v154 = vld [vmem:[%s0 + $0x478] sm:$0xff]
  %v155 = vld [vmem:[%s0 + $0x480] sm:$0xff]
  %v156 = vld [vmem:[%s0 + $0x488] sm:$0xff]
  %v157 = vld [vmem:[%s0 + $0x490] sm:$0xff]
  %v158 = vld [vmem:[%s0 + $0x498] sm:$0xff]
  %v159 = vld [vmem:[%s0 + $0x4a0] sm:$0xff]
  %v160 = vld [vmem:[%s0 + $0x4a8] sm:$0xff]
  %v161 = vld [vmem:[%s0 + $0x4b0] sm:$0xff]
  %v162 = vld [vmem:[%s0 + $0x4b8] sm:$0xff]
  %v163 = vld [vmem:[%s0 + $0x4c0] sm:$0xff]
  %v164 = vld [vmem:[%s0 + $0x4c8] sm:$0xff]
  %v165 = vld [vmem:[%s0 + $0x4d0] sm:$0xff]
  %v166 = vld [vmem:[%s0 + $0x4d8] sm:$0xff]
  %v167 = vld [vmem:[%s0 + $0x4e0] sm:$0xff]
  %v168 = vld [vmem:[%s0 + $0x4e8] sm:$0xff]
  %v169 = vld [vmem:[%s0 + $0x4f0] sm:$0xff]
  %v170 = vld [vmem:[%s0 + $0x4f8] sm:$0xff]
  %v171 = vld [vmem:[%s0 + $0x500] sm:$0xff]
  %v172 = vld [vmem:[%s0 + $0x508] sm:$0xff]
  %v173 = vld [vmem:[%s0 + $0x510] sm:$0xff]
  %v174 = vld [vmem:[%s0 + $0x518] sm:$0xff]
  %v175 = vld [vmem:[%s0 + $0x520] sm:$0xff]
  %v176 = vld [vmem:[%s0 + $0x528] sm:$0xff]
  %v177 = vld [vmem:[%s0 + $0x530] sm:$0xff]
  %v178 = vld [vmem:[%s0 + $0x538] sm:$0xff]
  %v179 = vld [vmem:[%s0 + $0x540] sm:$0xff]
  %v180 = vld [vmem:[%s0 + $0x548] sm:$0xff]
  %v181 = vld [vmem:[%s0 + $0x550] sm:$0xff]
  %v182 = vld [vmem:[%s0 + $0x558] sm:$0xff]
  %v183 = vld [vmem:[%s0 + $0x560] sm:$0xff]
  %v184 = vld [vmem:[%s0 + $0x568] sm:$0xff]
  %v185 = vld [vmem:[%s0 + $0x570] sm:$0xff]
  %v186 = vld [vmem:[%s0 + $0x578] sm:$0xff]
  %v187 = vld [vmem:[%s0 + $0x580] sm:$0xff]
  %v188 = vld [vmem:[%s0 + $0x588] sm:$0xff]
  %v189 = vld [vmem:[%s0 + $0x590] sm:$0xff]
  %v190 = vld [vmem:[%s0 + $0x598] sm:$0xff]
  %v191 = vld [vmem:[%s0 + $0x5a0] sm:$0xff]
  %v192 = vld [vmem:[%s0 + $0x5a8] sm:$0xff]
  %v193 = vld [vmem:[%s0 + $0x5b0] sm:$0xff]
  %v194 = vld [vmem:[%s0 + $0x5b8] sm:$0xff]
  %v195 = vld [vmem:[%s0 + $0x5c0] sm:$0xff]
  %v196 = vld [vmem:[%s0 + $0x5c8] sm:$0xff]
  %v197 = vld [vmem:[%s0 + $0x5d0] sm:$0xff]
  %v198 = vld [vmem:[%s0 + $0x5d8] sm:$0xff]
  %v199 = vld [vmem:[%s0 + $0x5e0] sm:$0xff]
  %v200 = vld [vmem:[%s0 + $0x5e8] sm:$0xff]
  %v201 = vld [vmem:[%s0 + $0x5f0] sm:$0xff]
  %v202 = vld [vmem:[%s0 + $0x5f8] sm:$0xff]
  %v203 = vld [vmem:[%s0 + $0x600] sm:$0xff]
  %v204 = vld [vmem:[%s0 + $0x608] sm:$0xff]
  %v205 = vld [vmem:[%s0 + $0x610] sm:$0xff]
  %v206 = vld [vmem:[%s0 + $0x618] sm:$0xff]
  %v207 = vld [vmem:[%s0 + $0x620] sm:$0xff]
  %v208 = vld [vmem:[%s0 + $0x628] sm:$0xff]
  %v209 = vld [vmem:[%s0 + $0x630] sm:$0xff]
  %v210 = vld [vmem:[%s0 + $0x638] sm:$0xff]
  %v211 = vld [vmem:[%s0 + $0x640] sm:$0xff]
  %v212 = vld [vmem:[%s0 + $0x648] sm:$0xff]
  %v213 = vld [vmem:[%s0 + $0x650] sm:$0xff]
  %v214 = vld [vmem:[%s0 + $0x658] sm:$0xff]
  %v215 = vld [vmem:[%s0 + $0x660] sm:$0xff]
  %v216 = vld [vmem:[%s0 + $0x668] sm:$0xff]
  %v217 = vld [vmem:[%s0 + $0x670] sm:$0xff]
  %v218 = vld [vmem:[%s0 + $0x678] sm:$0xff]
  %v219 = vld [vmem:[%s0 + $0x680] sm:$0xff]
  %v220 = vld [vmem:[%s0 + $0x688] sm:$0xff]
  %v221 = vld [vmem:[%s0 + $0x690] sm:$0xff]
  %v222 = vld [vmem:[%s0 + $0x698] sm:$0xff]
  %v223 = vld [vmem:[%s0 + $0x6a0] sm:$0xff]
  %v224 = vld [vmem:[%s0 + $0x6a8] sm:$0xff]
  %v225 = vld [vmem:[%s0 + $0x6b0] sm:$0xff]
  %v226 = vld [vmem:[%s0 + $0x6b8] sm:$0xff]
  %v227 = vld [vmem:[%s0 + $0x6c0] sm:$0xff]
  %v228 = vld [vmem:[%s0 + $0x6c8] sm:$0xff]
  %v229 = vld [vmem:[%s0 + $0x6d0] sm:$0xff]
  %v230 = vld [vmem:[%s0 + $0x6d8] sm:$0xff]
  %v231 = vld [vmem:[%s0 + $0x6e0] sm:$0xff]
  %v232 = vld [vmem:[%s0 + $0x6e8] sm:$0xff]
  %v233 = vld [vmem:[%s0 + $0x6f0] sm:$0xff]
  %v234 = vld [vmem:[%s0 + $0x6f8] sm:$0xff]
  %v235 = vld [vmem:[%s0 + $0x700] sm:$0xff]
  %v236 = vld [vmem:[%s0 + $0x708] sm:$0xff]
  %v237 = vld [vmem:[%s0 + $0x710] sm:$0xff]
  %v238 = vld [vmem:[%s0 + $0x718] sm:$0xff]
  %v239 = vld [vmem:[%s0 + $0x720] sm:$0xff]
  %v240 = vld [vmem:[%s0 + $0x728] sm:$0xff]
  %v241 = vld [vmem:[%s0 + $0x730] sm:$0xff]
  %v242 = vld [vmem:[%s0 + $0x738] sm:$0xff]
  %v243 = vld [vmem:[%s0 + $0x740] sm:$0xff]
  %v244 = vld [vmem:[%s0 + $0x748] sm:$0xff]
  %v245 = vld [vmem:[%s0 + $0x750] sm:$0xff]
  %v246 = vld [vmem:[%s0 + $0x758] sm:$0xff]
  %v247 = vld [vmem:[%s0 + $0x760] sm:$0xff]
  %v248 = vld [vmem:[%s0 + $0x768] sm:$0xff]
  %v249 = vld [vmem:[%s0 + $0x770] sm:$0xff]
  %v250 = vld [vmem:[%s0 + $0x778] sm:$0xff]
  %v251 = vld [vmem:[%s1] sm:$0xff]
  %v252 = vld [vmem:[%s1 + $0x8] sm:$0xff]
  %v253 = vld [vmem:[%s1 + $0x10] sm:$0xff]
  %v254 = vld [vmem:[%s1 + $0x18] sm:$0xff]
  %v255 = vld [vmem:[%s1 + $0x20] sm:$0xff]
  %v256 = vld [vmem:[%s1 + $0x28] sm:$0xff]
  %v257 = vld [vmem:[%s1 + $0x30] sm:$0xff]
  %v258 = vld [vmem:[%s1 + $0x38] sm:$0xff]
  %vm259 = vcmask 523264
  %v261 = vsel %vm259, %v258, 0
  %263 = vmatpush.msra.mxu0 %v26
  %264 = vmatpush.msra.mxu0 %v25
  %265 = vmatpush.msra.mxu0 %v24
  %266 = vmatpush.msra.mxu0 %v23
  %267 = vmatpush.msra.mxu0 %v22
  %268 = vmatpush.msra.mxu0 %v21
  %269 = vmatpush.msra.mxu0 %v20
  %270 = vmatpush.msra.mxu0 %v19
  %271 = vmatpush.msra.mxu0 %v18
  %272 = vmatpush.msra.mxu0 %v17
  %273 = vmatpush.msra.mxu0 %v16
  %274 = vmatpush.msra.mxu0 %v15
  %275 = vmatpush.msra.mxu0 %v14
  %276 = vmatpush.msra.mxu0 %v13
  %277 = vmatpush.msra.mxu0 %v12
  %278 = vmatpush.msra.mxu0 %v11
  %279 = vmatmul.f32.gmra.mxu0 %v251
  %v280 = vpop.f32.mrf.mxu0
  %v281 = vadd.f32 0.0, %v280
  %282 = vdwg.mxu0
  %283 = vmatpush.msra.mxu0 %v42
  %284 = vmatpush.msra.mxu0 %v41
  %285 = vmatpush.msra.mxu0 %v40
  %286 = vmatpush.msra.mxu0 %v39
  %287 = vmatpush.msra.mxu0 %v38
  %288 = vmatpush.msra.mxu0 %v37
  %289 = vmatpush.msra.mxu0 %v36
  %290 = vmatpush.msra.mxu0 %v35
  %291 = vmatpush.msra.mxu0 %v34
  %292 = vmatpush.msra.mxu0 %v33
  %293 = vmatpush.msra.mxu0 %v32
  %294 = vmatpush.msra.mxu0 %v31
  %295 = vmatpush.msra.mxu0 %v30
  %296 = vmatpush.msra.mxu0 %v29
  %297 = vmatpush.msra.mxu0 %v28
  %298 = vmatpush.msra.mxu0 %v27
  %299 = vmatmul.f32.gmra.mxu0 %v252
  %v300 = vpop.f32.mrf.mxu0
  %v301 = vadd.f32 %v281, %v300
  %302 = vdwg.mxu0
  %303 = vmatpush.msra.mxu0 %v58
  %304 = vmatpush.msra.mxu0 %v57
  %305 = vmatpush.msra.mxu0 %v56
  %306 = vmatpush.msra.mxu0 %v55
  %307 = vmatpush.msra.mxu0 %v54
  %308 = vmatpush.msra.mxu0 %v53
  %309 = vmatpush.msra.mxu0 %v52
  %310 = vmatpush.msra.mxu0 %v51
  %311 = vmatpush.msra.mxu0 %v50
  %312 = vmatpush.msra.mxu0 %v49
  %313 = vmatpush.msra.mxu0 %v48
  %314 = vmatpush.msra.mxu0 %v47
  %315 = vmatpush.msra.mxu0 %v46
  %316 = vmatpush.msra.mxu0 %v45
  %317 = vmatpush.msra.mxu0 %v44
  %318 = vmatpush.msra.mxu0 %v43
  %319 = vmatmul.f32.gmra.mxu0 %v253
  %v320 = vpop.f32.mrf.mxu0
  %v321 = vadd.f32 %v301, %v320
  %322 = vdwg.mxu0
  %323 = vmatpush.msra.mxu0 %v74
  %324 = vmatpush.msra.mxu0 %v73
  %325 = vmatpush.msra.mxu0 %v72
  %326 = vmatpush.msra.mxu0 %v71
  %327 = vmatpush.msra.mxu0 %v70
  %328 = vmatpush.msra.mxu0 %v69
  %329 = vmatpush.msra.mxu0 %v68
  %330 = vmatpush.msra.mxu0 %v67
  %331 = vmatpush.msra.mxu0 %v66
  %332 = vmatpush.msra.mxu0 %v65
  %333 = vmatpush.msra.mxu0 %v64
  %334 = vmatpush.msra.mxu0 %v63
  %335 = vmatpush.msra.mxu0 %v62
  %336 = vmatpush.msra.mxu0 %v61
  %337 = vmatpush.msra.mxu0 %v60
  %338 = vmatpush.msra.mxu0 %v59
  %339 = vmatmul.f32.gmra.mxu0 %v254
  %v340 = vpop.f32.mrf.mxu0
  %v341 = vadd.f32 %v321, %v340
  %342 = vdwg.mxu0
  %343 = vmatpush.msra.mxu0 %v90
  %344 = vmatpush.msra.mxu0 %v89
  %345 = vmatpush.msra.mxu0 %v88
  %346 = vmatpush.msra.mxu0 %v87
  %347 = vmatpush.msra.mxu0 %v86
  %348 = vmatpush.msra.mxu0 %v85
  %349 = vmatpush.msra.mxu0 %v84
  %350 = vmatpush.msra.mxu0 %v83
  %351 = vmatpush.msra.mxu0 %v82
  %352 = vmatpush.msra.mxu0 %v81
  %353 = vmatpush.msra.mxu0 %v80
  %354 = vmatpush.msra.mxu0 %v79
  %355 = vmatpush.msra.mxu0 %v78
  %356 = vmatpush.msra.mxu0 %v77
  %357 = vmatpush.msra.mxu0 %v76
  %358 = vmatpush.msra.mxu0 %v75
  %359 = vmatmul.f32.gmra.mxu0 %v255
  %v360 = vpop.f32.mrf.mxu0
  %v361 = vadd.f32 %v341, %v360
  %362 = vdwg.mxu0
  %363 = vmatpush.msra.mxu0 %v106
  %364 = vmatpush.msra.mxu0 %v105
  %365 = vmatpush.msra.mxu0 %v104
  %366 = vmatpush.msra.mxu0 %v103
  %367 = vmatpush.msra.mxu0 %v102
  %368 = vmatpush.msra.mxu0 %v101
  %369 = vmatpush.msra.mxu0 %v100
  %370 = vmatpush.msra.mxu0 %v99
  %371 = vmatpush.msra.mxu0 %v98
  %372 = vmatpush.msra.mxu0 %v97
  %373 = vmatpush.msra.mxu0 %v96
  %374 = vmatpush.msra.mxu0 %v95
  %375 = vmatpush.msra.mxu0 %v94
  %376 = vmatpush.msra.mxu0 %v93
  %377 = vmatpush.msra.mxu0 %v92
  %378 = vmatpush.msra.mxu0 %v91
  %379 = vmatmul.f32.gmra.mxu0 %v256
  %v380 = vpop.f32.mrf.mxu0
  %v381 = vadd.f32 %v361, %v380
  %382 = vdwg.mxu0
  %383 = vmatpush.msra.mxu0 %v122
  %384 = vmatpush.msra.mxu0 %v121
  %385 = vmatpush.msra.mxu0 %v120
  %386 = vmatpush.msra.mxu0 %v119
  %387 = vmatpush.msra.mxu0 %v118
  %388 = vmatpush.msra.mxu0 %v117
  %389 = vmatpush.msra.mxu0 %v116
  %390 = vmatpush.msra.mxu0 %v115
  %391 = vmatpush.msra.mxu0 %v114
  %392 = vmatpush.msra.mxu0 %v113
  %393 = vmatpush.msra.mxu0 %v112
  %394 = vmatpush.msra.mxu0 %v111
  %395 = vmatpush.msra.mxu0 %v110
  %396 = vmatpush.msra.mxu0 %v109
  %397 = vmatpush.msra.mxu0 %v108
  %398 = vmatpush.msra.mxu0 %v107
  %399 = vmatmul.f32.gmra.mxu0 %v257
  %v400 = vpop.f32.mrf.mxu0
  %v401 = vadd.f32 %v381, %v400
  %402 = vdwg.mxu0
  %403 = vmatpush.msra.mxu0 0.0
  %404 = vmatpush.msra.mxu0 0.0
  %405 = vmatpush.msra.mxu0 0.0
  %406 = vmatpush.msra.mxu0 0.0
  %407 = vmatpush.msra.mxu0 0.0
  %408 = vmatpush.msra.mxu0 0.0
  %409 = vmatpush.msra.mxu0 0.0
  %410 = vmatpush.msra.mxu0 0.0
  %411 = vmatpush.msra.mxu0 %v130
  %412 = vmatpush.msra.mxu0 %v129
  %413 = vmatpush.msra.mxu0 %v128
  %414 = vmatpush.msra.mxu0 %v127
  %415 = vmatpush.msra.mxu0 %v126
  %416 = vmatpush.msra.mxu0 %v125
  %417 = vmatpush.msra.mxu0 %v124
  %418 = vmatpush.msra.mxu0 %v123
  %419 = vmatmul.f32.gmra.mxu0 %v261
  %v420 = vpop.f32.mrf.mxu0
  %v421 = vadd.f32 %v401, %v420
  %422 = vdwg.mxu0
  %423 = vmatpush.msra.mxu0 %v146
  %424 = vmatpush.msra.mxu0 %v145
  %425 = vmatpush.msra.mxu0 %v144
  %426 = vmatpush.msra.mxu0 %v143
  %427 = vmatpush.msra.mxu0 %v142
  %428 = vmatpush.msra.mxu0 %v141
  %429 = vmatpush.msra.mxu0 %v140
  %430 = vmatpush.msra.mxu0 %v139
  %431 = vmatpush.msra.mxu0 %v138
  %432 = vmatpush.msra.mxu0 %v137
  %433 = vmatpush.msra.mxu0 %v136
  %434 = vmatpush.msra.mxu0 %v135
  %435 = vmatpush.msra.mxu0 %v134
  %436 = vmatpush.msra.mxu0 %v133
  %437 = vmatpush.msra.mxu0 %v132
  %438 = vmatpush.msra.mxu0 %v131
  %439 = vmatmul.f32.gmra.mxu0 %v251
  %v440 = vpop.f32.mrf.mxu0
  %v441 = vadd.f32 0.0, %v440
  %442 = vdwg.mxu0
  %443 = vmatpush.msra.mxu0 %v162
  %444 = vmatpush.msra.mxu0 %v161
  %445 = vmatpush.msra.mxu0 %v160
  %446 = vmatpush.msra.mxu0 %v159
  %447 = vmatpush.msra.mxu0 %v158
  %448 = vmatpush.msra.mxu0 %v157
  %449 = vmatpush.msra.mxu0 %v156
  %450 = vmatpush.msra.mxu0 %v155
  %451 = vmatpush.msra.mxu0 %v154
  %452 = vmatpush.msra.mxu0 %v153
  %453 = vmatpush.msra.mxu0 %v152
  %454 = vmatpush.msra.mxu0 %v151
  %455 = vmatpush.msra.mxu0 %v150
  %456 = vmatpush.msra.mxu0 %v149
  %457 = vmatpush.msra.mxu0 %v148
  %458 = vmatpush.msra.mxu0 %v147
  %459 = vmatmul.f32.gmra.mxu0 %v252
  %v460 = vpop.f32.mrf.mxu0
  %v461 = vadd.f32 %v441, %v460
  %462 = vdwg.mxu0
  %463 = vmatpush.msra.mxu0 %v178
  %464 = vmatpush.msra.mxu0 %v177
  %465 = vmatpush.msra.mxu0 %v176
  %466 = vmatpush.msra.mxu0 %v175
  %467 = vmatpush.msra.mxu0 %v174
  %468 = vmatpush.msra.mxu0 %v173
  %469 = vmatpush.msra.mxu0 %v172
  %470 = vmatpush.msra.mxu0 %v171
  %471 = vmatpush.msra.mxu0 %v170
  %472 = vmatpush.msra.mxu0 %v169
  %473 = vmatpush.msra.mxu0 %v168
  %474 = vmatpush.msra.mxu0 %v167
  %475 = vmatpush.msra.mxu0 %v166
  %476 = vmatpush.msra.mxu0 %v165
  %477 = vmatpush.msra.mxu0 %v164
  %478 = vmatpush.msra.mxu0 %v163
  %479 = vmatmul.f32.gmra.mxu0 %v253
  %v480 = vpop.f32.mrf.mxu0
  %v481 = vadd.f32 %v461, %v480
  %482 = vdwg.mxu0
  %483 = vmatpush.msra.mxu0 %v194
  %484 = vmatpush.msra.mxu0 %v193
  %485 = vmatpush.msra.mxu0 %v192
  %486 = vmatpush.msra.mxu0 %v191
  %487 = vmatpush.msra.mxu0 %v190
  %488 = vmatpush.msra.mxu0 %v189
  %489 = vmatpush.msra.mxu0 %v188
  %490 = vmatpush.msra.mxu0 %v187
  %491 = vmatpush.msra.mxu0 %v186
  %492 = vmatpush.msra.mxu0 %v185
  %493 = vmatpush.msra.mxu0 %v184
  %494 = vmatpush.msra.mxu0 %v183
  %495 = vmatpush.msra.mxu0 %v182
  %496 = vmatpush.msra.mxu0 %v181
  %497 = vmatpush.msra.mxu0 %v180
  %498 = vmatpush.msra.mxu0 %v179
  %499 = vmatmul.f32.gmra.mxu0 %v254
  %v500 = vpop.f32.mrf.mxu0
  %v501 = vadd.f32 %v481, %v500
  %502 = vdwg.mxu0
  %503 = vmatpush.msra.mxu0 %v210
  %504 = vmatpush.msra.mxu0 %v209
  %505 = vmatpush.msra.mxu0 %v208
  %506 = vmatpush.msra.mxu0 %v207
  %507 = vmatpush.msra.mxu0 %v206
  %508 = vmatpush.msra.mxu0 %v205
  %509 = vmatpush.msra.mxu0 %v204
  %510 = vmatpush.msra.mxu0 %v203
  %511 = vmatpush.msra.mxu0 %v202
  %512 = vmatpush.msra.mxu0 %v201
  %513 = vmatpush.msra.mxu0 %v200
  %514 = vmatpush.msra.mxu0 %v199
  %515 = vmatpush.msra.mxu0 %v198
  %516 = vmatpush.msra.mxu0 %v197
  %517 = vmatpush.msra.mxu0 %v196
  %518 = vmatpush.msra.mxu0 %v195
  %519 = vmatmul.f32.gmra.mxu0 %v255
  %v520 = vpop.f32.mrf.mxu0
  %v521 = vadd.f32 %v501, %v520
  %522 = vdwg.mxu0
  %523 = vmatpush.msra.mxu0 %v226
  %524 = vmatpush.msra.mxu0 %v225
  %525 = vmatpush.msra.mxu0 %v224
  %526 = vmatpush.msra.mxu0 %v223
  %527 = vmatpush.msra.mxu0 %v222
  %528 = vmatpush.msra.mxu0 %v221
  %529 = vmatpush.msra.mxu0 %v220
  %530 = vmatpush.msra.mxu0 %v219
  %531 = vmatpush.msra.mxu0 %v218
  %532 = vmatpush.msra.mxu0 %v217
  %533 = vmatpush.msra.mxu0 %v216
  %534 = vmatpush.msra.mxu0 %v215
  %535 = vmatpush.msra.mxu0 %v214
  %536 = vmatpush.msra.mxu0 %v213
  %537 = vmatpush.msra.mxu0 %v212
  %538 = vmatpush.msra.mxu0 %v211
  %539 = vmatmul.f32.gmra.mxu0 %v256
  %v540 = vpop.f32.mrf.mxu0
  %v541 = vadd.f32 %v521, %v540
  %542 = vdwg.mxu0
  %543 = vmatpush.msra.mxu0 %v242
  %544 = vmatpush.msra.mxu0 %v241
  %545 = vmatpush.msra.mxu0 %v240
  %546 = vmatpush.msra.mxu0 %v239
  %547 = vmatpush.msra.mxu0 %v238
  %548 = vmatpush.msra.mxu0 %v237
  %549 = vmatpush.msra.mxu0 %v236
  %550 = vmatpush.msra.mxu0 %v235
  %551 = vmatpush.msra.mxu0 %v234
  %552 = vmatpush.msra.mxu0 %v233
  %553 = vmatpush.msra.mxu0 %v232
  %554 = vmatpush.msra.mxu0 %v231
  %555 = vmatpush.msra.mxu0 %v230
  %556 = vmatpush.msra.mxu0 %v229
  %557 = vmatpush.msra.mxu0 %v228
  %558 = vmatpush.msra.mxu0 %v227
  %559 = vmatmul.f32.gmra.mxu0 %v257
  %v560 = vpop.f32.mrf.mxu0
  %v561 = vadd.f32 %v541, %v560
  %562 = vdwg.mxu0
  %563 = vmatpush.msra.mxu0 0.0
  %564 = vmatpush.msra.mxu0 0.0
  %565 = vmatpush.msra.mxu0 0.0
  %566 = vmatpush.msra.mxu0 0.0
  %567 = vmatpush.msra.mxu0 0.0
  %568 = vmatpush.msra.mxu0 0.0
  %569 = vmatpush.msra.mxu0 0.0
  %570 = vmatpush.msra.mxu0 0.0
  %571 = vmatpush.msra.mxu0 %v250
  %572 = vmatpush.msra.mxu0 %v249
  %573 = vmatpush.msra.mxu0 %v248
  %574 = vmatpush.msra.mxu0 %v247
  %575 = vmatpush.msra.mxu0 %v246
  %576 = vmatpush.msra.mxu0 %v245
  %577 = vmatpush.msra.mxu0 %v244
  %578 = vmatpush.msra.mxu0 %v243
  %579 = vmatmul.f32.gmra.mxu0 %v261
  %v580 = vpop.f32.mrf.mxu0
  %v581 = vadd.f32 %v561, %v580
  %582 = vdwg.mxu0
  %v583 = vsel %vm259, %v421, 0.0
  %584 = vadd.xlane.f32.xlu0 %v583
  %v585 = vpop.xlane.xlu0 %584
  %v586 = vsel %vm259, %v581, 0.0
  %587 = vadd.xlane.f32.xlu0 %v586
  %v588 = vpop.xlane.xlu0 %587
  %vm589 = vcmask 7168
  %590 = vst.msk [vmem:[%s2] sm:$0xff] %vm589, %v585
  %591 = vst.msk [vmem:[%s2 + $0x8] sm:$0xff] %vm589, %v588
  // Predicated region
  $region10: #{tpu_custom_call.1} parent=0 // pred_check
    _
  $region11: #{tpu_custom_call.1} parent=0 // pred_check_branch
    %593 = sbr.rel (0) target = $region13
  $region12: #{tpu_custom_call.1} parent=0 // pred_region
    _
  $region13: #{tpu_custom_call.1} parent=0 // pred_fallthru
    _
  // Predicated region
  $region14: #{tpu_custom_call.1} parent=0 // pred_check
    _
  $region15: #{tpu_custom_call.1} parent=0 // pred_check_branch
    %595 = sbr.rel (0) target = $region17
  $region16: #{tpu_custom_call.1} parent=0 // pred_region
    _
  $region17: #{tpu_custom_call.1} parent=0 // pred_fallthru
    _

</llo_original>
